<compile_context>
chip_gen: v7x
topology: tpu7x:2x2x1
jax: 0.10.0
libtpu: 0.0.40
codegen_flags: <defaults>
</compile_context>

<pallas_src>
import jax
import jax.numpy as jnp
from jax import lax
from jax.experimental import pallas as pl
from jax.experimental.pallas import tpu as pltpu

LANE = 128


def _make_logreg_kernel(num_labels: int):
    """num_labels = real (unpadded) label count L; everything else comes from ref shapes."""

    def kernel(bow_ref, w_ref, b_ref, out_ref, acc_ref):
        # bow_ref: (TB, S)      int32 token ids (one bag per row)
        # w_ref  : (L_pad, TV)  f32 weight tile, PyTorch [labels, vocab] layout
        # b_ref  : (1, L_pad)   f32 bias (padded lanes are zero; masked later)
        # out_ref: (TB, L_pad)  f32 log-probabilities (padded lanes -> -inf)
        # acc_ref: (TB, L_pad)  f32 logits accumulator (persists across vocab steps)
        k = pl.program_id(1)
        nk = pl.num_programs(1)

        @pl.when(k == 0)
        def _init():
            acc_ref[...] = jnp.zeros_like(acc_ref)

        TB, S = bow_ref.shape
        L_pad, TV = w_ref.shape

        tokens = bow_ref[...]                                        # (TB, S) int32
        # Vocab ids covered by this tile: [k*TV, (k+1)*TV), laid out on lanes.
        vocab_ids = k * TV + lax.broadcasted_iota(jnp.int32, (TB, TV), 1)

        # Bag-of-words counts for this vocab tile. S static & small -> unrolled
        # Python loop of 2-D compares; never build a 3-D (TB, S, TV) one-hot.
        counts = jnp.zeros((TB, TV), jnp.float32)
        for s in range(S):
            tok_s = tokens[:, s:s + 1]                               # (TB, 1) static slice
            counts = counts + (tok_s == vocab_ids).astype(jnp.float32)

        # Partial logits: counts @ W_tile^T, contracting the vocab tile on the MXU.
        acc_ref[...] += lax.dot_general(
            counts, w_ref[...],
            dimension_numbers=(((1,), (1,)), ((), ())),
            preferred_element_type=jnp.float32,
        )

        @pl.when(k == nk - 1)
        def _finalize():
            logits = acc_ref[...] + b_ref[...]                       # (TB, L_pad)
            # Mask padded label lanes so they don't affect max / logsumexp.
            lane = lax.broadcasted_iota(jnp.int32, logits.shape, 1)
            logits = jnp.where(lane < num_labels, logits, -jnp.inf)
            m = jnp.max(logits, axis=1, keepdims=True)
            shifted = logits - m
            lse = jnp.log(jnp.sum(jnp.exp(shifted), axis=1, keepdims=True))
            out_ref[...] = shifted - lse                             # lane-dense store

    return kernel


def _pick_tile(dim: int, candidates) -> int:
    for c in candidates:
        if dim >= c and dim % c == 0:
            return c
    return dim  # fall back to full dim (allowed by the (8,128) rule)


def logistic_regression_forward(bow, weight_lv, bias_l):
    """bow: (B, S) int32; weight_lv: (L, V) float32 (PyTorch nn.Linear layout); bias_l: (L,)."""
    B, S = bow.shape
    L, V = weight_lv.shape

    L_pad = max(LANE, ((L + LANE - 1) // LANE) * LANE)
    TV = _pick_tile(V, (2048, 1024, 512, 256, 128))   # vocab tile (reduction axis)
    TB = _pick_tile(B, (512, 256, 128))               # batch tile (parallel axis)

    # Pad labels to a full lane group; keep V as the lane axis of the weight
    # (no transpose, dense loads). Padded rows/lanes are zero and masked in-kernel.
    w_pad = jnp.zeros((L_pad, V), jnp.float32).at[:L, :].set(weight_lv.astype(jnp.float32))
    b_pad = jnp.zeros((1, L_pad), jnp.float32).at[0, :L].set(bias_l.astype(jnp.float32))

    grid = (B // TB, V // TV)

    out_padded = pl.pallas_call(
        _make_logreg_kernel(L),
        out_shape=jax.ShapeDtypeStruct((B, L_pad), jnp.float32),
        grid=grid,
        in_specs=[
            pl.BlockSpec((TB, S), lambda i, k: (i, 0)),       # bow: batch tile, resident over k
            pl.BlockSpec((L_pad, TV), lambda i, k: (0, k)),   # weight: streamed along vocab
            pl.BlockSpec((1, L_pad), lambda i, k: (0, 0)),    # bias
        ],
        out_specs=pl.BlockSpec((TB, L_pad), lambda i, k: (i, 0)),
        scratch_shapes=[pltpu.VMEM((TB, L_pad), jnp.float32)],
        compiler_params=pltpu.CompilerParams(
            dimension_semantics=("parallel", "arbitrary"),
            vmem_limit_bytes=32 * 1024 * 1024,
        ),
    )(bow, w_pad, b_pad)

    return out_padded[:, :L]


def _reference(bow, weight_lv, bias_l):
    V = weight_lv.shape[1]
    counts = jnp.sum(jax.nn.one_hot(bow, V, dtype=jnp.float32), axis=1)
    logits = counts @ weight_lv.T + bias_l
    return jax.nn.log_softmax(logits, axis=1)


if __name__ == "__main__":
    # Small, deterministic synthetic setup:
    #   len(TEXT.vocab)  = V = 128
    #   len(LABEL.vocab) = L = 8
    #   batch B = 4, bag (sequence) length S = 8
    B, S, V, L = 4, 8, 128, 8

    key = jax.random.PRNGKey(0)
    k_bow, k_w, k_b = jax.random.split(key, 3)

    bow = jax.random.randint(k_bow, (B, S), 0, V, dtype=jnp.int32)

    # nn.Linear(V, L) init: uniform(-1/sqrt(V), 1/sqrt(V)) for weight (L, V) and bias (L,)
    bound = 1.0 / jnp.sqrt(jnp.float32(V))
    weight_lv = jax.random.uniform(k_w, (L, V), jnp.float32, -bound, bound)
    bias_l = jax.random.uniform(k_b, (L,), jnp.float32, -bound, bound)

    out = logistic_regression_forward(bow, weight_lv, bias_l)
    out = jax.block_until_ready(out)

    ref = _reference(bow, weight_lv, bias_l)
    assert out.shape == (B, L)
    assert jnp.allclose(out, ref, atol=1e-5, rtol=1e-5)

    print("KERNEL_OK")
</pallas_src>

<mosaic_0001>
module attributes {stable_mosaic.version = 11 : i64} {
  func.func @kernel(%arg0: i32, %arg1: i32, %arg2: memref<4x8xi32, #tpu.memory_space<vmem>>, %arg3: memref<128x128xf32, #tpu.memory_space<vmem>>, %arg4: memref<1x128xf32, #tpu.memory_space<vmem>>, %arg5: memref<4x128xf32, #tpu.memory_space<vmem>>, %arg6: memref<4x128xf32, #tpu.memory_space<vmem>>) attributes {dimension_semantics = [#tpu.dimension_semantics<parallel>, #tpu.dimension_semantics<arbitrary>], iteration_bounds = array<i64: 1, 1>, scalar_prefetch = 0 : i64, scratch_operands = 1 : i64, tpu.core_type = #tpu.core_type<tc>, window_params = [{transform_indices = @transform_0, window_bounds = array<i64: 4, 8>}, {transform_indices = @transform_1, window_bounds = array<i64: 128, 128>}, {pipeline_mode = #tpu.pipeline_mode<synchronous>, transform_indices = @transform_2, window_bounds = array<i64: 1, 128>}, {transform_indices = @transform_3, window_bounds = array<i64: 4, 128>}]} {
    %c0_i32 = arith.constant 0 : i32
    %0 = arith.cmpi eq, %arg1, %c0_i32 : i32
    %1 = arith.extui %0 : i1 to i32
    %c0_i32_0 = arith.constant 0 : i32
    %2 = arith.cmpi ne, %1, %c0_i32_0 : i32
    scf.if %2 {
      %cst_11 = arith.constant 0.000000e+00 : f32
      %65 = vector.broadcast %cst_11 : f32 to vector<4x128xf32>
      %c0_12 = arith.constant 0 : index
      %c0_13 = arith.constant 0 : index
      %66 = vector.load %arg6[%c0_12, %c0_13] : memref<4x128xf32, #tpu.memory_space<vmem>>, vector<4x128xf32>
      tpu.vector_store %arg6[%c0_12, %c0_13], %65 {strides = array<i32>} : memref<4x128xf32, #tpu.memory_space<vmem>>, vector<4x128xf32>,
    } else {
    }
    %c0 = arith.constant 0 : index
    %c0_1 = arith.constant 0 : index
    %3 = vector.load %arg2[%c0, %c0_1] : memref<4x8xi32, #tpu.memory_space<vmem>>, vector<4x8xi32>
    %c128_i32 = arith.constant 128 : i32
    %4 = arith.muli %arg1, %c128_i32 : i32
    %5 = tpu.iota {dimensions = array<i32: 1>} : vector<4x128xi32>
    %6 = vector.broadcast %4 : i32 to vector<4x128xi32>
    %7 = arith.addi %6, %5 : vector<4x128xi32>
    %cst = arith.constant 0.000000e+00 : f32
    %8 = vector.broadcast %cst : f32 to vector<4x128xf32>
    %9 = vector.extract_strided_slice %3 {offsets = [0, 0], sizes = [4, 1], strides = [1, 1]} : vector<4x8xi32> to vector<4x1xi32>
    %10 = vector.broadcast %9 : vector<4x1xi32> to vector<4x128xi32>
    %11 = arith.cmpi eq, %10, %7 : vector<4x128xi32>
    %12 = arith.extui %11 : vector<4x128xi1> to vector<4x128xi32>
    %13 = arith.sitofp %12 : vector<4x128xi32> to vector<4x128xf32>
    %14 = arith.addf %8, %13 : vector<4x128xf32>
    %15 = vector.extract_strided_slice %3 {offsets = [0, 1], sizes = [4, 1], strides = [1, 1]} : vector<4x8xi32> to vector<4x1xi32>
    %16 = vector.broadcast %15 : vector<4x1xi32> to vector<4x128xi32>
    %17 = arith.cmpi eq, %16, %7 : vector<4x128xi32>
    %18 = arith.extui %17 : vector<4x128xi1> to vector<4x128xi32>
    %19 = arith.sitofp %18 : vector<4x128xi32> to vector<4x128xf32>
    %20 = arith.addf %14, %19 : vector<4x128xf32>
    %21 = vector.extract_strided_slice %3 {offsets = [0, 2], sizes = [4, 1], strides = [1, 1]} : vector<4x8xi32> to vector<4x1xi32>
    %22 = vector.broadcast %21 : vector<4x1xi32> to vector<4x128xi32>
    %23 = arith.cmpi eq, %22, %7 : vector<4x128xi32>
    %24 = arith.extui %23 : vector<4x128xi1> to vector<4x128xi32>
    %25 = arith.sitofp %24 : vector<4x128xi32> to vector<4x128xf32>
    %26 = arith.addf %20, %25 : vector<4x128xf32>
    %27 = vector.extract_strided_slice %3 {offsets = [0, 3], sizes = [4, 1], strides = [1, 1]} : vector<4x8xi32> to vector<4x1xi32>
    %28 = vector.broadcast %27 : vector<4x1xi32> to vector<4x128xi32>
    %29 = arith.cmpi eq, %28, %7 : vector<4x128xi32>
    %30 = arith.extui %29 : vector<4x128xi1> to vector<4x128xi32>
    %31 = arith.sitofp %30 : vector<4x128xi32> to vector<4x128xf32>
    %32 = arith.addf %26, %31 : vector<4x128xf32>
    %33 = vector.extract_strided_slice %3 {offsets = [0, 4], sizes = [4, 1], strides = [1, 1]} : vector<4x8xi32> to vector<4x1xi32>
    %34 = vector.broadcast %33 : vector<4x1xi32> to vector<4x128xi32>
    %35 = arith.cmpi eq, %34, %7 : vector<4x128xi32>
    %36 = arith.extui %35 : vector<4x128xi1> to vector<4x128xi32>
    %37 = arith.sitofp %36 : vector<4x128xi32> to vector<4x128xf32>
    %38 = arith.addf %32, %37 : vector<4x128xf32>
    %39 = vector.extract_strided_slice %3 {offsets = [0, 5], sizes = [4, 1], strides = [1, 1]} : vector<4x8xi32> to vector<4x1xi32>
    %40 = vector.broadcast %39 : vector<4x1xi32> to vector<4x128xi32>
    %41 = arith.cmpi eq, %40, %7 : vector<4x128xi32>
    %42 = arith.extui %41 : vector<4x128xi1> to vector<4x128xi32>
    %43 = arith.sitofp %42 : vector<4x128xi32> to vector<4x128xf32>
    %44 = arith.addf %38, %43 : vector<4x128xf32>
    %45 = vector.extract_strided_slice %3 {offsets = [0, 6], sizes = [4, 1], strides = [1, 1]} : vector<4x8xi32> to vector<4x1xi32>
    %46 = vector.broadcast %45 : vector<4x1xi32> to vector<4x128xi32>
    %47 = arith.cmpi eq, %46, %7 : vector<4x128xi32>
    %48 = arith.extui %47 : vector<4x128xi1> to vector<4x128xi32>
    %49 = arith.sitofp %48 : vector<4x128xi32> to vector<4x128xf32>
    %50 = arith.addf %44, %49 : vector<4x128xf32>
    %51 = vector.extract_strided_slice %3 {offsets = [0, 7], sizes = [4, 1], strides = [1, 1]} : vector<4x8xi32> to vector<4x1xi32>
    %52 = vector.broadcast %51 : vector<4x1xi32> to vector<4x128xi32>
    %53 = arith.cmpi eq, %52, %7 : vector<4x128xi32>
    %54 = arith.extui %53 : vector<4x128xi1> to vector<4x128xi32>
    %55 = arith.sitofp %54 : vector<4x128xi32> to vector<4x128xf32>
    %56 = arith.addf %50, %55 : vector<4x128xf32>
    %c0_2 = arith.constant 0 : index
    %c0_3 = arith.constant 0 : index
    %57 = vector.load %arg6[%c0_2, %c0_3] : memref<4x128xf32, #tpu.memory_space<vmem>>, vector<4x128xf32>
    %c0_4 = arith.constant 0 : index
    %c0_5 = arith.constant 0 : index
    %58 = vector.load %arg3[%c0_4, %c0_5] : memref<128x128xf32, #tpu.memory_space<vmem>>, vector<128x128xf32>
    %cst_6 = arith.constant dense<0.000000e+00> : vector<4x128xf32>
    %59 = tpu.matmul %56, %58, %cst_6 {dimension_numbers = #tpu.dot_dimension_numbers<[1], [1], [0], [0], [0, 0, 1, 0], [], []>} : vector<4x128xf32>, vector<128x128xf32>, vector<4x128xf32> -> vector<4x128xf32>
    %60 = arith.addf %57, %59 : vector<4x128xf32>
    %c0_7 = arith.constant 0 : index
    %c0_8 = arith.constant 0 : index
    %61 = vector.load %arg6[%c0_7, %c0_8] : memref<4x128xf32, #tpu.memory_space<vmem>>, vector<4x128xf32>
    tpu.vector_store %arg6[%c0_7, %c0_8], %60 {strides = array<i32>} : memref<4x128xf32, #tpu.memory_space<vmem>>, vector<4x128xf32>,
    %c0_i32_9 = arith.constant 0 : i32
    %62 = arith.cmpi eq, %arg1, %c0_i32_9 : i32
    %63 = arith.extui %62 : i1 to i32
    %c0_i32_10 = arith.constant 0 : i32
    %64 = arith.cmpi ne, %63, %c0_i32_10 : i32
    scf.if %64 {
      %c0_11 = arith.constant 0 : index
      %c0_12 = arith.constant 0 : index
      %65 = vector.load %arg6[%c0_11, %c0_12] : memref<4x128xf32, #tpu.memory_space<vmem>>, vector<4x128xf32>
      %c0_13 = arith.constant 0 : index
      %c0_14 = arith.constant 0 : index
      %66 = vector.load %arg4[%c0_13, %c0_14] : memref<1x128xf32, #tpu.memory_space<vmem>>, vector<1x128xf32>
      %67 = vector.broadcast %66 : vector<1x128xf32> to vector<4x128xf32>
      %68 = arith.addf %65, %67 : vector<4x128xf32>
      %69 = tpu.iota {dimensions = array<i32: 1>} : vector<4x128xi32>
      %c8_i32 = arith.constant 8 : i32
      %70 = vector.broadcast %c8_i32 : i32 to vector<4x128xi32>
      %71 = arith.cmpi slt, %69, %70 : vector<4x128xi32>
      %cst_15 = arith.constant 0xFF800000 : f32
      %72 = vector.broadcast %cst_15 : f32 to vector<4x128xf32>
      %73 = arith.select %71, %68, %72 : vector<4x128xi1>, vector<4x128xf32>
      %cst_16 = arith.constant dense<0xFF800000> : vector<4xf32>
      %74 = vector.multi_reduction <maximumf>, %73, %cst_16 [1] : vector<4x128xf32> to vector<4xf32>
      %75 = vector.shape_cast %74 : vector<4xf32> to vector<4x1xf32>
      %76 = vector.broadcast %75 : vector<4x1xf32> to vector<4x128xf32>
      %77 = arith.subf %73, %76 : vector<4x128xf32>
      %78 = math.exp %77 : vector<4x128xf32>
      %cst_17 = arith.constant dense<0.000000e+00> : vector<4xf32>
      %79 = vector.multi_reduction <add>, %78, %cst_17 [1] : vector<4x128xf32> to vector<4xf32>
      %80 = vector.shape_cast %79 : vector<4xf32> to vector<4x1xf32>
      %81 = math.log %80 : vector<4x1xf32>
      %82 = vector.broadcast %81 : vector<4x1xf32> to vector<4x128xf32>
      %83 = arith.subf %77, %82 : vector<4x128xf32>
      %c0_18 = arith.constant 0 : index
      %c0_19 = arith.constant 0 : index
      %84 = vector.load %arg5[%c0_18, %c0_19] : memref<4x128xf32, #tpu.memory_space<vmem>>, vector<4x128xf32>
      tpu.vector_store %arg5[%c0_18, %c0_19], %83 {strides = array<i32>} : memref<4x128xf32, #tpu.memory_space<vmem>>, vector<4x128xf32>,
    } else {
    }
    return
  }
  func.func @transform_0(%arg0: i32, %arg1: i32) -> (i32, i32) {
    %c0_i32 = arith.constant 0 : i32
    %c0_i32_0 = arith.constant 0 : i32
    return %arg0, %c0_i32 : i32, i32
  }
  func.func @transform_1(%arg0: i32, %arg1: i32) -> (i32, i32) {
    %c0_i32 = arith.constant 0 : i32
    %c0_i32_0 = arith.constant 0 : i32
    return %c0_i32, %arg1 : i32, i32
  }
  func.func @transform_2(%arg0: i32, %arg1: i32) -> (i32, i32) {
    %c0_i32 = arith.constant 0 : i32
    %c0_i32_0 = arith.constant 0 : i32
    %c0_i32_1 = arith.constant 0 : i32
    return %c0_i32, %c0_i32_0 : i32, i32
  }
  func.func @transform_3(%arg0: i32, %arg1: i32) -> (i32, i32) {
    %c0_i32 = arith.constant 0 : i32
    %c0_i32_0 = arith.constant 0 : i32
    return %arg0, %c0_i32 : i32, i32
  }
}

</mosaic_0001>

<llo_original>
// kernel: tpu_custom_call.1
$region0: #{tpu_custom_call.1}
  #allocation0 [shape = 'u32[]', space=smem, size = 0x4, offset = 0x4, fixed_abs, tag = 'smem constant byte address 0x4 - core index']
  #allocation1 [shape = 'u32[144,128]{1,0:T(1,128)}', space=vmem, size = 0x12000, scoped, tag = 'internal scratch']
  #allocation2 [shape = 'f32[4,128]{1,0:T(4,128)}', space=vmem, size = 0x800, scoped, tag = 'scratch operand']
  %s0 = inlined_call_operand.hbm [shape: s32[4,8], index: 0, kind: input, shape index: {}]
  %s1 = inlined_call_operand.hbm [shape: f32[128,128], index: 1, kind: input, shape index: {}]
  %s2 = inlined_call_operand.vmem [shape: f32[1,128], index: 2, kind: input, shape index: {}]
  %s3 = inlined_call_operand.hbm [shape: f32[4,128], index: 3, kind: output, shape index: {}]
  %s4 = sld [smem:[#allocation0]]
  $region38: #{tpu_custom_call.1} parent=0
    _
  %s6 = ssub.s32 1, %s4
  %s7 = scalar_select 0, %s6, %s4
  $region1: #{tpu_custom_call.1} parent=0
    #allocation3 [shape = 'u8[2048]{0}', space=vmem, size = 0x800, scoped, tag = 'input window, operand 0, single buffered']
    #allocation4 [shape = 's32[1]{0}', space=sflag, size = 0x4, scoped, tag = 'scoped memory for tpu_custom_call.1']
    #allocation5 [shape = 's32[1]{0}', space=sflag, size = 0x4, scoped, tag = 'scoped memory for tpu_custom_call.1']
    #allocation6 [shape = 'u8[65536]{0}', space=vmem, size = 0x10000, scoped, tag = 'input window, operand 1, single buffered']
    #allocation7 [shape = 's32[1]{0}', space=sflag, size = 0x4, scoped, tag = 'scoped memory for tpu_custom_call.1']
    #allocation8 [shape = 'u8[2048]{0}', space=vmem, size = 0x800, scoped, tag = 'output window, operand 0, single buffered']
    %8 = vsyncpa [#allocation4], 0
    %9 = vsyncpa [#allocation7], 0
    %10 = vsyncpa [#allocation5], 0
    // Predicated region
    $region2: #{tpu_custom_call.1} parent=1 // pred_check
      _
    $region3: #{tpu_custom_call.1} parent=1 // pred_check_branch
      %12 = sbr.rel (0) target = $region5
    $region4: #{tpu_custom_call.1} parent=1 // pred_region
      %s14 = ssub.s32 64, 64
      %15 = vsyncadd [#allocation4], %s14
      %s17 = sshll.u32 [#allocation3], 4
      %s18 = int_to_ptr.vmem [resolvable:$true] %s17
      %20 = dma.hbm_to_vmem [thread:$0]  %s0, 64, %s18, [#allocation4]
    $region5: #{tpu_custom_call.1} parent=1 // pred_fallthru
      _
    // Predicated region
    $region6: #{tpu_custom_call.1} parent=1 // pred_check
      _
    $region7: #{tpu_custom_call.1} parent=1 // pred_check_branch
      %22 = sbr.rel (0) target = $region9
    $region8: #{tpu_custom_call.1} parent=1 // pred_region
      %s24 = ssub.s32 2048, 2048
      %25 = vsyncadd [#allocation7], %s24
      %s26 = sshll.u32 [#allocation6], 4
      %s27 = int_to_ptr.vmem [resolvable:$true] %s26
      %32 = dma.hbm_to_vmem [thread:$0]  %s1, 2048, %s27, [#allocation7], 128, 128, 8
    $region9: #{tpu_custom_call.1} parent=1 // pred_fallthru
      _
    // Predicated region
    $region10: #{tpu_custom_call.1} parent=1 // pred_check
      _
    $region11: #{tpu_custom_call.1} parent=1 // pred_check_branch
      %34 = sbr.rel (0) target = $region13
    $region12: #{tpu_custom_call.1} parent=1 // pred_region
      _
    $region13: #{tpu_custom_call.1} parent=1 // pred_fallthru
      _
    // Predicated region
    $region14: #{tpu_custom_call.1} parent=1 // pred_check
      _
    $region15: #{tpu_custom_call.1} parent=1 // pred_check_branch
      %36 = sbr.rel (0) target = $region17
    $region16: #{tpu_custom_call.1} parent=1 // pred_region
      %37 = dma.done [#allocation4], 64
    $region17: #{tpu_custom_call.1} parent=1 // pred_fallthru
      _
    // Predicated region
    $region18: #{tpu_custom_call.1} parent=1 // pred_check
      _
    $region19: #{tpu_custom_call.1} parent=1 // pred_check_branch
      %39 = sbr.rel (0) target = $region21
    $region20: #{tpu_custom_call.1} parent=1 // pred_region
      %40 = dma.done [#allocation7], 2048
    $region21: #{tpu_custom_call.1} parent=1 // pred_fallthru
      _
    %p41 = scmp.eq.s32.totalorder 0, 0
    // Predicated region
    $region22: #{tpu_custom_call.1} parent=1 // pred_check
      %p42 = pneg %p41
    $region23: #{tpu_custom_call.1} parent=1 // pred_check_branch
      %44 = sbr.rel (%p42) target = $region25
    $region24: #{tpu_custom_call.1} parent=1 // pred_region
      %45 = vst [vmem:[#allocation2] sm:$0xf] 0.0
    $region25: #{tpu_custom_call.1} parent=1 // pred_fallthru
      _
    %v46 = vld [vmem:[#allocation3] sm:$0xf]
    %s47 = smul.u32 0, 128
    %v48 = vlaneseq
    %v49 = vand.u32 %v48, 127
    %v50 = vstv %s47
    %v51 = vadd.s32 %v50, %v49
    %52 = vset.pattern.permute.xlu0 0
    %53 = vperm.xlu0 %52, %v46
    %v54 = vpop.permute.xlu0 %53
    %vm55 = vcmp.eq.s32.totalorder %v54, %v51
    %v56 = vsel %vm55, 1, 0
    %v57 = vcvt.s32.f32 %v56
    %v58 = vadd.f32 %v57, 0.0
    %59 = vset.pattern.permute.xlu0 1
    %60 = vperm.xlu0 %59, %v46
    %v61 = vpop.permute.xlu0 %60
    %vm62 = vcmp.eq.s32.totalorder %v61, %v51
    %v63 = vsel %vm62, 1, 0
    %v64 = vcvt.s32.f32 %v63
    %v65 = vadd.f32 %v58, %v64
    %66 = vset.pattern.permute.xlu0 2
    %67 = vperm.xlu0 %66, %v46
    %v68 = vpop.permute.xlu0 %67
    %vm69 = vcmp.eq.s32.totalorder %v68, %v51
    %v70 = vsel %vm69, 1, 0
    %v71 = vcvt.s32.f32 %v70
    %v72 = vadd.f32 %v65, %v71
    %73 = vset.pattern.permute.xlu0 3
    %74 = vperm.xlu0 %73, %v46
    %v75 = vpop.permute.xlu0 %74
    %vm76 = vcmp.eq.s32.totalorder %v75, %v51
    %v77 = vsel %vm76, 1, 0
    %v78 = vcvt.s32.f32 %v77
    %v79 = vadd.f32 %v72, %v78
    %80 = vset.pattern.permute.xlu0 4
    %81 = vperm.xlu0 %80, %v46
    %v82 = vpop.permute.xlu0 %81
    %vm83 = vcmp.eq.s32.totalorder %v82, %v51
    %v84 = vsel %vm83, 1, 0
    %v85 = vcvt.s32.f32 %v84
    %v86 = vadd.f32 %v79, %v85
    %87 = vset.pattern.permute.xlu0 5
    %88 = vperm.xlu0 %87, %v46
    %v89 = vpop.permute.xlu0 %88
    %vm90 = vcmp.eq.s32.totalorder %v89, %v51
    %v91 = vsel %vm90, 1, 0
    %v92 = vcvt.s32.f32 %v91
    %v93 = vadd.f32 %v86, %v92
    %94 = vset.pattern.permute.xlu0 6
    %95 = vperm.xlu0 %94, %v46
    %v96 = vpop.permute.xlu0 %95
    %vm97 = vcmp.eq.s32.totalorder %v96, %v51
    %v98 = vsel %vm97, 1, 0
    %v99 = vcvt.s32.f32 %v98
    %v100 = vadd.f32 %v93, %v99
    %101 = vset.pattern.permute.xlu0 7
    %102 = vperm.xlu0 %101, %v46
    %v103 = vpop.permute.xlu0 %102
    %vm104 = vcmp.eq.s32.totalorder %v103, %v51
    %v105 = vsel %vm104, 1, 0
    %v106 = vcvt.s32.f32 %v105
    %v107 = vadd.f32 %v100, %v106
    %v108 = vld [vmem:[#allocation2] sm:$0xf]
    %v109 = vld [vmem:[#allocation6] sm:$0xff]
    %v110 = vld [vmem:[#allocation6 + $0x8] sm:$0xff]
    %v111 = vld [vmem:[#allocation6 + $0x10] sm:$0xff]
    %v112 = vld [vmem:[#allocation6 + $0x18] sm:$0xff]
    %v113 = vld [vmem:[#allocation6 + $0x20] sm:$0xff]
    %v114 = vld [vmem:[#allocation6 + $0x28] sm:$0xff]
    %v115 = vld [vmem:[#allocation6 + $0x30] sm:$0xff]
    %v116 = vld [vmem:[#allocation6 + $0x38] sm:$0xff]
    %v117 = vld [vmem:[#allocation6 + $0x40] sm:$0xff]
    %v118 = vld [vmem:[#allocation6 + $0x48] sm:$0xff]
    %v119 = vld [vmem:[#allocation6 + $0x50] sm:$0xff]
    %v120 = vld [vmem:[#allocation6 + $0x58] sm:$0xff]
    %v121 = vld [vmem:[#allocation6 + $0x60] sm:$0xff]
    %v122 = vld [vmem:[#allocation6 + $0x68] sm:$0xff]
    %v123 = vld [vmem:[#allocation6 + $0x70] sm:$0xff]
    %v124 = vld [vmem:[#allocation6 + $0x78] sm:$0xff]
    %125 = vmatprep.subr.mxu0 0.0
    %126 = vmatpush1.xpose.msra.mxu0 %v109
    %127 = vmatprep.subr.mxu0 0.0
    %128 = vmatpush1.xpose.msra.mxu0 %v110
    %129 = vmatprep.subr.mxu0 0.0
    %130 = vmatpush1.xpose.msra.mxu0 %v111
    %131 = vmatprep.subr.mxu0 0.0
    %132 = vmatpush1.xpose.msra.mxu0 %v112
    %133 = vmatprep.subr.mxu0 0.0
    %134 = vmatpush1.xpose.msra.mxu0 %v113
    %135 = vmatprep.subr.mxu0 0.0
    %136 = vmatpush1.xpose.msra.mxu0 %v114
    %137 = vmatprep.subr.mxu0 0.0
    %138 = vmatpush1.xpose.msra.mxu0 %v115
    %139 = vmatprep.subr.mxu0 0.0
    %140 = vmatpush1.xpose.msra.mxu0 %v116
    %141 = vmatprep.subr.mxu0 0.0
    %142 = vmatpush1.xpose.msra.mxu0 %v117
    %143 = vmatprep.subr.mxu0 0.0
    %144 = vmatpush1.xpose.msra.mxu0 %v118
    %145 = vmatprep.subr.mxu0 0.0
    %146 = vmatpush1.xpose.msra.mxu0 %v119
    %147 = vmatprep.subr.mxu0 0.0
    %148 = vmatpush1.xpose.msra.mxu0 %v120
    %149 = vmatprep.subr.mxu0 0.0
    %150 = vmatpush1.xpose.msra.mxu0 %v121
    %151 = vmatprep.subr.mxu0 0.0
    %152 = vmatpush1.xpose.msra.mxu0 %v122
    %153 = vmatprep.subr.mxu0 0.0
    %154 = vmatpush1.xpose.msra.mxu0 %v123
    %155 = vmatprep.subr.mxu0 0.0
    %156 = vmatpush1.xpose.msra.mxu0 %v124
    %157 = vmatprep.subr.mxu0 0.0
    %158 = vmatpush1.xpose.msra.mxu0 0.0
    %159 = vmatprep.subr.mxu0 0.0
    %160 = vmatpush1.xpose.msra.mxu0 0.0
    %161 = vmatprep.subr.mxu0 0.0
    %162 = vmatpush1.xpose.msra.mxu0 0.0
    %163 = vmatprep.subr.mxu0 0.0
    %164 = vmatpush1.xpose.msra.mxu0 0.0
    %165 = vmatprep.subr.mxu0 0.0
    %166 = vmatpush1.xpose.msra.mxu0 0.0
    %167 = vmatprep.subr.mxu0 0.0
    %168 = vmatpush1.xpose.msra.mxu0 0.0
    %169 = vmatprep.subr.mxu0 0.0
    %170 = vmatpush1.xpose.msra.mxu0 0.0
    %171 = vmatprep.subr.mxu0 0.0
    %172 = vmatpush1.xpose.msra.mxu0 0.0
    %173 = vmatprep.subr.mxu0 0.0
    %174 = vmatpush1.xpose.msra.mxu0 0.0
    %175 = vmatprep.subr.mxu0 0.0
    %176 = vmatpush1.xpose.msra.mxu0 0.0
    %177 = vmatprep.subr.mxu0 0.0
    %178 = vmatpush1.xpose.msra.mxu0 0.0
    %179 = vmatprep.subr.mxu0 0.0
    %180 = vmatpush1.xpose.msra.mxu0 0.0
    %181 = vmatprep.subr.mxu0 0.0
    %182 = vmatpush1.xpose.msra.mxu0 0.0
    %183 = vmatprep.subr.mxu0 0.0
    %184 = vmatpush1.xpose.msra.mxu0 0.0
    %185 = vmatprep.subr.mxu0 0.0
    %186 = vmatpush1.xpose.msra.mxu0 0.0
    %187 = vmatprep.subr.mxu0 0.0
    %188 = vmatpush1.xpose.msra.mxu0 0.0
    %189 = vmatprep.mubr.f32.mxu0 0.0
    %190 = vmatmul.mubr.f32.gmra.mrb[0].mxu0 %v107
    %v191 = vpop.f32.mrb[0].mxu0
    %v192 = vadd.f32 0.0, %v191
    %v193 = vpop.f32.mrb[0].mxu0
    %194 = vdwg.mxu0
    %v195 = vadd.f32 %v108, %v192
    %196 = vst [vmem:[#allocation2] sm:$0xf] %v195
    // Predicated region
    $region26: #{tpu_custom_call.1} parent=1 // pred_check
      %p197 = pneg %p41
    $region27: #{tpu_custom_call.1} parent=1 // pred_check_branch
      %199 = sbr.rel (%p197) target = $region29
    $region28: #{tpu_custom_call.1} parent=1 // pred_region
      %v200 = vld [vmem:[#allocation2] sm:$0xf]
      %v201 = vld [vmem:[%s2] sm:$0x1]
      %v203 = vlaneseq
      %v204 = vshrl.u32 %v203, 7
      %v205 = vsub.s32 0, %v204
      %v206 = vrot.slane %v201, %v205
      %v208 = vadd.f32 %v200, %v206
      %vm209 = vcmp.lt.s32.totalorder %v49, 8
      %v210 = vsel %vm209, %v208, -inf
      %vm211 = vcmask 1043456
      %v212 = vsel %vm211, %v210, -inf
      %213 = vmax.xlane.f32.xlu0 %v212
      %v214 = vpop.xlane.xlu0 %213
      %v215 = vsub.f32 %v210, %v214
      %v216 = vmul.f32 %v215, 1.442695
      %v217 = vpow.pop %v216
      %v218 = vsel %vm211, %v217, 0.0
      %219 = vadd.xlane.f32.xlu0 %v218
      %v220 = vpop.xlane.xlu0 %219
      %v221 = vlog2.pop %v220
      %v222 = vmul.f32 %v221, 0.6931472
      %v223 = vsub.f32 %v215, %v222
      %224 = vst [vmem:[#allocation8] sm:$0xf] %v223
    $region29: #{tpu_custom_call.1} parent=1 // pred_fallthru
      _
    // Predicated region
    $region30: #{tpu_custom_call.1} parent=1 // pred_check
      _
    $region31: #{tpu_custom_call.1} parent=1 // pred_check_branch
      %226 = sbr.rel (0) target = $region33
    $region32: #{tpu_custom_call.1} parent=1 // pred_region
      %s228 = ssub.s32 64, 64
      %229 = vsyncadd [#allocation5], %s228
      %s231 = sshll.u32 [#allocation8], 4
      %s232 = int_to_ptr.vmem [resolvable:$true] %s231
      %234 = dma.vmem_to_hbm [thread:$0]  %s232, 64, %s3, [#allocation5]
    $region33: #{tpu_custom_call.1} parent=1 // pred_fallthru
      _
    // Predicated region
    $region34: #{tpu_custom_call.1} parent=1 // pred_check
      _
    $region35: #{tpu_custom_call.1} parent=1 // pred_check_branch
      %236 = sbr.rel (0) target = $region37
    $region36: #{tpu_custom_call.1} parent=1 // pred_region
      %237 = dma.done [#allocation5], 64
    $region37: #{tpu_custom_call.1} parent=1 // pred_fallthru
      _
    %238 = vsyncpa [#allocation4], 1
    %239 = vsyncpa [#allocation7], 1
    %240 = vsyncpa [#allocation5], 1

</llo_original>
